<compile_context>
chip_gen: v7x
topology: tpu7x:2x2x1
jax: 0.10.0
libtpu: 0.0.40
codegen_flags: <defaults>
</compile_context>

<pallas_src>
import jax
import jax.numpy as jnp
from jax.experimental import pallas as pl
from jax.experimental.pallas import tpu as pltpu


def _round_up(x, m):
    return (x + m - 1) // m * m


# ----------------------------------------------------------------------------
# Banded-GEMM packing of a 3x3 / stride 1 / pad 1 conv layer (built in XLA,
# once, at construction time).
#
# Lane-packed activation layout:  A[row, w*C + c]  (w includes a 1-col halo
# for non-final layers), plus zero pad lanes and a "ones" lane at kp-1.
# For each kernel row kh we build slab[kh] of shape (kp, np) such that
#   out[r, :] = relu( sum_kh  A[r + kh, :] @ slab[kh] )
# Bias is folded into slab[1][kp-1, :] (the centre tap of a real output row
# always reads a real input row, whose ones-lane is 1).  Intermediate layers
# also propagate the ones lane: slab[1][kp-1, np-1] = 1.
# ----------------------------------------------------------------------------
def _pack_layer_slab(w_oihw, bias, W, kp, np_, intermediate):
    Cout, Cin, KH, KW = w_oihw.shape
    assert KH == 3 and KW == 3, "only 3x3 convs are packed here"
    Wp = W + 2
    G = Wp if intermediate else W

    wt = jnp.transpose(w_oihw, (2, 3, 1, 0)).astype(jnp.float32)   # (KH,KW,Cin,Cout)
    g = jnp.arange(G)
    w_conv = g - 1 if intermediate else g           # conv output spatial index
    valid_g = (w_conv >= 0) & (w_conv < W)          # W-halo groups stay zero
    w_in = jnp.arange(Wp)
    kw = jnp.arange(KW)
    sel = (w_in[None, :, None] == (w_conv[None, None, :] + kw[:, None, None]))
    sel = (sel & valid_g[None, None, :]).astype(jnp.float32)       # (KW, Wp, G)

    M = jnp.einsum('hkio,kwg->hwigo', wt, sel).reshape(KH, Wp * Cin, G * Cout)
    M = jnp.pad(M, ((0, 0), (0, kp - Wp * Cin), (0, np_ - G * Cout)))

    # bias (masked on W-halo groups) + ones-lane propagation, centre tap only
    brow = (valid_g.astype(jnp.float32)[:, None]
            * bias.astype(jnp.float32)[None, :]).reshape(G * Cout)
    brow = jnp.pad(brow, (0, np_ - G * Cout))
    if intermediate:
        brow = brow.at[np_ - 1].set(1.0)
    M = M.at[1, kp - 1, :].set(brow)
    return M


# ----------------------------------------------------------------------------
# Fused kernel: the whole Conv3x3+ReLU stack, batch folded, single grid step.
# ----------------------------------------------------------------------------
def _make_stack_kernel(L, Ra, Hb, H, off0):
    def kernel(*refs):
        # refs = [xp, slab_0..slab_{L-1}, out, mid_0..mid_{L-2}]
        xp_ref = refs[0]
        w_refs = refs[1:1 + L]
        o_ref = refs[1 + L]
        mid_refs = refs[2 + L:]

        # Zero the 8 never-written tail rows of each scratch once per call
        # (they are read by the shifted dot operands but never stored to).
        for m in mid_refs:
            rows, lanes = m.shape
            m[Ra:rows, :] = jnp.zeros((rows - Ra, lanes), m.dtype)

        cur = xp_ref                       # f32, folded rows x lanes
        for l in range(L):
            w = w_refs[l]                  # (3, kp, np) bf16
            a0 = cur[0:Ra, :].astype(jnp.bfloat16)
            a1 = cur[1:Ra + 1, :].astype(jnp.bfloat16)
            a2 = cur[2:Ra + 2, :].astype(jnp.bfloat16)
            acc = jnp.dot(a0, w[0], preferred_element_type=jnp.float32)
            acc = acc + jnp.dot(a1, w[1], preferred_element_type=jnp.float32)
            acc = acc + jnp.dot(a2, w[2], preferred_element_type=jnp.float32)
            act = jnp.maximum(acc, 0.0)    # f32 elementwise (bias already in GEMM)

            if l == L - 1:
                o_ref[...] = act.astype(o_ref.dtype)   # (Ra, 128*) dense store
            else:
                # mask junk rows (block-local row outside [off, off+H)) so the
                # H-halo / pad rows of the intermediate buffer are exactly 0.
                off = off0 - l
                rows_i = jax.lax.broadcasted_iota(jnp.int32, act.shape, 0)
                lr = jnp.bitwise_and(rows_i, Hb - 1)   # Hb is a power of two
                valid = jnp.logical_and(lr >= off, lr < off + H)
                mid = mid_refs[l]
                mid[0:Ra, :] = jnp.where(valid, act, 0.0).astype(mid.dtype)
                cur = mid
        return

    return kernel


class PackedConvReluStack:
    """One fused pallas_call for a chain of Conv2d(3x3,s1,p1,bias)+ReLU layers."""

    def __init__(self, layer_params, n, h, w, cin):
        self.N, self.H, self.W, self.Cin = n, h, w, cin
        L = len(layer_params)
        chans = [cin] + [wt.shape[0] for (wt, _) in layer_params]
        for l, (wt, _) in enumerate(layer_params):
            assert wt.shape[1] == chans[l] and wt.shape[2:] == (3, 3)
        Wp = w + 2
        self.L, self.Cout = L, chans[-1]

        # Row geometry: batch folded, per-element block Hb rows (power of two
        # so the row mask is a bitwise AND), padded-data offset drifts by 1
        # per layer so every store starts at row 0 (aligned, unmasked).
        self.off0 = L - 1
        self.Hb = max(8, pl.next_power_of_2(h + 2 + self.off0))
        self.Ra = n * self.Hb              # GEMM M rows (multiple of 8)
        self.Rb = self.Ra + 8              # buffer rows (covers +2 row shift)

        # Lane geometry: layer l's K padding equals layer l-1's N padding so
        # the ones-lane and pad lanes chain consistently.
        kps, nps = [], []
        kp = _round_up(Wp * cin + 1, 128)
        for l in range(L):
            inter = l < L - 1
            g = Wp if inter else w
            np_ = _round_up(g * chans[l + 1] + (1 if inter else 0), 128)
            kps.append(kp)
            nps.append(np_)
            kp = np_
        self.kps, self.nps = kps, nps

        # Pack banded weight slabs once (hoisted out of the hot path); bf16.
        self.slabs = [
            _pack_layer_slab(wt, b, w, kps[l], nps[l], l < L - 1).astype(jnp.bfloat16)
            for l, (wt, b) in enumerate(layer_params)]

        kern = _make_stack_kernel(L, self.Ra, self.Hb, h, self.off0)
        in_specs = [pl.BlockSpec((self.Rb, kps[0]), lambda i: (0, 0))]
        for l in range(L):
            in_specs.append(pl.BlockSpec((3, kps[l], nps[l]), lambda i: (0, 0, 0)))
        out_spec = pl.BlockSpec((self.Ra, nps[-1]), lambda i: (0, 0))
        scratch = [pltpu.VMEM((self.Rb, nps[l]), jnp.float32) for l in range(L - 1)]

        flops = int(sum(6 * self.Ra * kps[l] * nps[l] for l in range(L)))
        bytes_acc = int(self.Rb * kps[0] * 4
                        + sum(int(s.size) * 2 for s in self.slabs)
                        + self.Ra * nps[-1] * 4)

        self._call = pl.pallas_call(
            kern,
            out_shape=jax.ShapeDtypeStruct((self.Ra, nps[-1]), jnp.float32),
            grid_spec=pltpu.PrefetchScalarGridSpec(
                num_scalar_prefetch=0,
                grid=(1,),                       # single step: batch is folded
                in_specs=in_specs,
                out_specs=out_spec,
                scratch_shapes=scratch),
            compiler_params=pltpu.CompilerParams(
                dimension_semantics=("arbitrary",)),
            cost_estimate=pl.CostEstimate(
                flops=flops, transcendentals=0, bytes_accessed=bytes_acc),
        )

    def pack_input(self, x_nhwc):
        """NHWC -> folded, (8,128)-aligned, lane-packed rows with a ones lane."""
        n, h, w, c = x_nhwc.shape
        Wp = w + 2
        xr = jnp.pad(x_nhwc.astype(jnp.float32),
                     ((0, 0), (1, 1), (1, 1), (0, 0))).reshape(n, h + 2, Wp * c)
        blk = jnp.pad(xr, ((0, 0),
                           (self.off0, self.Hb - self.off0 - (h + 2)),
                           (0, self.kps[0] - 1 - Wp * c)))
        folded = jnp.pad(blk.reshape(n * self.Hb, self.kps[0] - 1),
                         ((0, self.Rb - n * self.Hb), (0, 0)))
        ones = jnp.ones((self.Rb, 1), jnp.float32)
        return jnp.concatenate([folded, ones], axis=-1)

    def __call__(self, x_nhwc):
        n, h, w, c = x_nhwc.shape
        assert (n, h, w, c) == (self.N, self.H, self.W, self.Cin)
        xp = self.pack_input(x_nhwc)
        out = self._call(xp, *self.slabs)                       # (Ra, np_last)
        out = out[:, :self.W * self.Cout]
        out = out.reshape(self.N, self.Hb, self.W, self.Cout)[:, :self.H]
        return out                                              # (N, H, W, Cout)


# ----------------------------------------------------------------------------
# Network container (mirrors Network.forward_train dispatch)
# ----------------------------------------------------------------------------
class NetworkPallas:
    def __init__(self, blocks, condition=None, out_list=None, input_shape=None):
        # blocks: list of blocks; each block is a list of (weight_oihw, bias)
        # corresponding to an nn.Sequential of Conv2d(3x3,pad=1)+ReLU pairs.
        self.blocks = blocks
        self.condition = condition
        self.out_list = out_list
        n, c, h, w = input_shape
        if condition in ('add', 'concat'):
            # torch semantics: every child model gets the SAME input
            self.stacks = [PackedConvReluStack(blk, n, h, w, c) for blk in blocks]
        elif out_list is None:
            # seq_forward with no taps: fuse the whole chain into one call
            layers = [lp for blk in blocks for lp in blk]
            self.stacks = [PackedConvReluStack(layers, n, h, w, c)]
        else:
            self.stacks = []
            cin = c
            for blk in blocks:
                self.stacks.append(PackedConvReluStack(blk, n, h, w, cin))
                cin = blk[-1][0].shape[0]
        # TODO(synk): 'interpolate'/'append'/'merge'/'map'/'Process_list'/quant/
        # prune branches depend on external vega operators; not reproduced here.

    def __call__(self, x_nchw):
        x = jnp.transpose(x_nchw, (0, 2, 3, 1))                  # NCHW -> NHWC
        if self.condition == 'add':
            out = None
            for st in self.stacks:
                y = st(x)
                out = y if out is None else out + y
        elif self.condition == 'concat':
            out = jnp.concatenate([st(x) for st in self.stacks], axis=-1)
        else:
            if self.out_list is None:
                out = self.stacks[0](x)
            else:
                outs, cur = [], x
                for idx, st in enumerate(self.stacks):
                    cur = st(cur)
                    if idx in self.out_list:
                        outs.append(jnp.transpose(cur, (0, 3, 1, 2)))
                return outs
        return jnp.transpose(out, (0, 3, 1, 2))                  # back to NCHW


def make_blocks(key, cin, couts):
    """Deterministic Conv2d-style init; one [Conv,ReLU] block per cout."""
    blocks = []
    c_prev = cin
    for cout in couts:
        key, kw_, kb = jax.random.split(key, 3)
        fan_in = c_prev * 3 * 3
        w = jax.random.normal(kw_, (cout, c_prev, 3, 3), jnp.float32)
        w = w * (2.0 / fan_in) ** 0.5
        b = 0.01 * jax.random.normal(kb, (cout,), jnp.float32)
        blocks.append([(w, b)])
        c_prev = cout
    return blocks


if __name__ == "__main__":
    key = jax.random.PRNGKey(0)
    k_in, k_par = jax.random.split(key)

    N, C, H, W = 2, 4, 16, 16
    x = jax.random.normal(k_in, (N, C, H, W), jnp.float32)

    blocks = make_blocks(k_par, C, couts=[8, 8])
    net = NetworkPallas(blocks, condition=None, out_list=None,
                        input_shape=(N, C, H, W))     # seq_forward path

    fwd = jax.jit(net.__call__)
    y = jax.block_until_ready(fwd(x))
    assert y.shape == (N, 8, H, W), y.shape

    # sanity check against pure-JAX reference conv chain (f32 reference;
    # kernel uses bf16 MXU operands with f32 accumulation -> loose tolerance)
    def ref_block(x_nchw, w, b):
        out = jax.lax.conv_general_dilated(
            x_nchw, w, window_strides=(1, 1), padding=((1, 1), (1, 1)),
            dimension_numbers=('NCHW', 'OIHW', 'NCHW'))
        return jnp.maximum(out + b[None, :, None, None], 0.0)

    y_ref = x
    for blk in blocks:
        for (w, b) in blk:
            y_ref = ref_block(y_ref, w, b)
    assert jnp.allclose(y, y_ref, atol=1e-1, rtol=5e-2), \
        float(jnp.max(jnp.abs(y - y_ref)))

    print("KERNEL_OK")
</pallas_src>

<mosaic_0001>
module attributes {stable_mosaic.version = 11 : i64} {
  func.func @kernel(%arg0: i32, %arg1: memref<72x128xf32, #tpu.memory_space<vmem>>, %arg2: memref<3x128x256xbf16, #tpu.memory_space<vmem>>, %arg3: memref<3x256x128xbf16, #tpu.memory_space<vmem>>, %arg4: memref<64x128xf32, #tpu.memory_space<vmem>>, %arg5: memref<72x256xf32, #tpu.memory_space<vmem>>) attributes {dimension_semantics = [#tpu.dimension_semantics<arbitrary>], iteration_bounds = array<i64: 1>, scalar_prefetch = 0 : i64, scratch_operands = 1 : i64, tpu.core_type = #tpu.core_type<tc>, window_params = [{pipeline_mode = #tpu.pipeline_mode<synchronous>, transform_indices = @transform_0, window_bounds = array<i64: 72, 128>}, {pipeline_mode = #tpu.pipeline_mode<synchronous>, transform_indices = @transform_1, window_bounds = array<i64: 3, 128, 256>}, {pipeline_mode = #tpu.pipeline_mode<synchronous>, transform_indices = @transform_2, window_bounds = array<i64: 3, 256, 128>}, {pipeline_mode = #tpu.pipeline_mode<synchronous>, transform_indices = @transform_3, window_bounds = array<i64: 64, 128>}]} {
    %cst = arith.constant 0.000000e+00 : f32
    %0 = vector.broadcast %cst : f32 to vector<8x256xf32>
    %c64 = arith.constant 64 : index
    %c0 = arith.constant 0 : index
    %1 = vector.load %arg5[%c64, %c0] : memref<72x256xf32, #tpu.memory_space<vmem>>, vector<8x256xf32>
    tpu.vector_store %arg5[%c64, %c0], %0 {strides = array<i32>} : memref<72x256xf32, #tpu.memory_space<vmem>>, vector<8x256xf32>,
    %c0_0 = arith.constant 0 : index
    %c0_1 = arith.constant 0 : index
    %2 = vector.load %arg1[%c0_0, %c0_1] : memref<72x128xf32, #tpu.memory_space<vmem>>, vector<64x128xf32>
    %3 = arith.truncf %2 : vector<64x128xf32> to vector<64x128xbf16>
    %c1 = arith.constant 1 : index
    %c0_2 = arith.constant 0 : index
    %4 = vector.load %arg1[%c1, %c0_2] : memref<72x128xf32, #tpu.memory_space<vmem>>, vector<64x128xf32>
    %5 = arith.truncf %4 : vector<64x128xf32> to vector<64x128xbf16>
    %c2 = arith.constant 2 : index
    %c0_3 = arith.constant 0 : index
    %6 = vector.load %arg1[%c2, %c0_3] : memref<72x128xf32, #tpu.memory_space<vmem>>, vector<64x128xf32>
    %7 = arith.truncf %6 : vector<64x128xf32> to vector<64x128xbf16>
    %c0_4 = arith.constant 0 : index
    %c0_5 = arith.constant 0 : index
    %c0_6 = arith.constant 0 : index
    %8 = vector.load %arg2[%c0_4, %c0_5, %c0_6] : memref<3x128x256xbf16, #tpu.memory_space<vmem>>, vector<1x128x256xbf16>
    %9 = vector.shape_cast %8 : vector<1x128x256xbf16> to vector<128x256xbf16>
    %cst_7 = arith.constant dense<0.000000e+00> : vector<64x256xf32>
    %10 = tpu.matmul %3, %9, %cst_7 {dimension_numbers = #tpu.dot_dimension_numbers<[1], [0], [0], [1], [0, 0, 1, 1], [], []>} : vector<64x128xbf16>, vector<128x256xbf16>, vector<64x256xf32> -> vector<64x256xf32>
    %c1_8 = arith.constant 1 : index
    %c0_9 = arith.constant 0 : index
    %c0_10 = arith.constant 0 : index
    %11 = vector.load %arg2[%c1_8, %c0_9, %c0_10] : memref<3x128x256xbf16, #tpu.memory_space<vmem>>, vector<1x128x256xbf16>
    %12 = vector.shape_cast %11 : vector<1x128x256xbf16> to vector<128x256xbf16>
    %cst_11 = arith.constant dense<0.000000e+00> : vector<64x256xf32>
    %13 = tpu.matmul %5, %12, %cst_11 {dimension_numbers = #tpu.dot_dimension_numbers<[1], [0], [0], [1], [0, 0, 1, 1], [], []>} : vector<64x128xbf16>, vector<128x256xbf16>, vector<64x256xf32> -> vector<64x256xf32>
    %14 = arith.addf %10, %13 : vector<64x256xf32>
    %c2_12 = arith.constant 2 : index
    %c0_13 = arith.constant 0 : index
    %c0_14 = arith.constant 0 : index
    %15 = vector.load %arg2[%c2_12, %c0_13, %c0_14] : memref<3x128x256xbf16, #tpu.memory_space<vmem>>, vector<1x128x256xbf16>
    %16 = vector.shape_cast %15 : vector<1x128x256xbf16> to vector<128x256xbf16>
    %cst_15 = arith.constant dense<0.000000e+00> : vector<64x256xf32>
    %17 = tpu.matmul %7, %16, %cst_15 {dimension_numbers = #tpu.dot_dimension_numbers<[1], [0], [0], [1], [0, 0, 1, 1], [], []>} : vector<64x128xbf16>, vector<128x256xbf16>, vector<64x256xf32> -> vector<64x256xf32>
    %18 = arith.addf %14, %17 : vector<64x256xf32>
    %cst_16 = arith.constant 0.000000e+00 : f32
    %19 = vector.broadcast %cst_16 : f32 to vector<64x256xf32>
    %20 = arith.maximumf %18, %19 : vector<64x256xf32>
    %21 = tpu.iota {dimensions = array<i32: 0>} : vector<64x256xi32>
    %c31_i32 = arith.constant 31 : i32
    %22 = vector.broadcast %c31_i32 : i32 to vector<64x256xi32>
    %23 = arith.andi %21, %22 : vector<64x256xi32>
    %c1_i32 = arith.constant 1 : i32
    %24 = vector.broadcast %c1_i32 : i32 to vector<64x256xi32>
    %25 = arith.cmpi sge, %23, %24 : vector<64x256xi32>
    %c17_i32 = arith.constant 17 : i32
    %26 = vector.broadcast %c17_i32 : i32 to vector<64x256xi32>
    %27 = arith.cmpi slt, %23, %26 : vector<64x256xi32>
    %28 = arith.andi %25, %27 : vector<64x256xi1>
    %cst_17 = arith.constant 0.000000e+00 : f32
    %29 = vector.broadcast %cst_17 : f32 to vector<64x256xf32>
    %30 = arith.select %28, %20, %29 : vector<64x256xi1>, vector<64x256xf32>
    %c0_18 = arith.constant 0 : index
    %c0_19 = arith.constant 0 : index
    %31 = vector.load %arg5[%c0_18, %c0_19] : memref<72x256xf32, #tpu.memory_space<vmem>>, vector<64x256xf32>
    tpu.vector_store %arg5[%c0_18, %c0_19], %30 {strides = array<i32>} : memref<72x256xf32, #tpu.memory_space<vmem>>, vector<64x256xf32>,
    %c0_20 = arith.constant 0 : index
    %c0_21 = arith.constant 0 : index
    %32 = vector.load %arg5[%c0_20, %c0_21] : memref<72x256xf32, #tpu.memory_space<vmem>>, vector<64x256xf32>
    %33 = arith.truncf %32 : vector<64x256xf32> to vector<64x256xbf16>
    %c1_22 = arith.constant 1 : index
    %c0_23 = arith.constant 0 : index
    %34 = vector.load %arg5[%c1_22, %c0_23] : memref<72x256xf32, #tpu.memory_space<vmem>>, vector<64x256xf32>
    %35 = arith.truncf %34 : vector<64x256xf32> to vector<64x256xbf16>
    %c2_24 = arith.constant 2 : index
    %c0_25 = arith.constant 0 : index
    %36 = vector.load %arg5[%c2_24, %c0_25] : memref<72x256xf32, #tpu.memory_space<vmem>>, vector<64x256xf32>
    %37 = arith.truncf %36 : vector<64x256xf32> to vector<64x256xbf16>
    %c0_26 = arith.constant 0 : index
    %c0_27 = arith.constant 0 : index
    %c0_28 = arith.constant 0 : index
    %38 = vector.load %arg3[%c0_26, %c0_27, %c0_28] : memref<3x256x128xbf16, #tpu.memory_space<vmem>>, vector<1x256x128xbf16>
    %39 = vector.shape_cast %38 : vector<1x256x128xbf16> to vector<256x128xbf16>
    %cst_29 = arith.constant dense<0.000000e+00> : vector<64x128xf32>
    %40 = tpu.matmul %33, %39, %cst_29 {dimension_numbers = #tpu.dot_dimension_numbers<[1], [0], [0], [1], [0, 0, 1, 1], [], []>} : vector<64x256xbf16>, vector<256x128xbf16>, vector<64x128xf32> -> vector<64x128xf32>
    %c1_30 = arith.constant 1 : index
    %c0_31 = arith.constant 0 : index
    %c0_32 = arith.constant 0 : index
    %41 = vector.load %arg3[%c1_30, %c0_31, %c0_32] : memref<3x256x128xbf16, #tpu.memory_space<vmem>>, vector<1x256x128xbf16>
    %42 = vector.shape_cast %41 : vector<1x256x128xbf16> to vector<256x128xbf16>
    %cst_33 = arith.constant dense<0.000000e+00> : vector<64x128xf32>
    %43 = tpu.matmul %35, %42, %cst_33 {dimension_numbers = #tpu.dot_dimension_numbers<[1], [0], [0], [1], [0, 0, 1, 1], [], []>} : vector<64x256xbf16>, vector<256x128xbf16>, vector<64x128xf32> -> vector<64x128xf32>
    %44 = arith.addf %40, %43 : vector<64x128xf32>
    %c2_34 = arith.constant 2 : index
    %c0_35 = arith.constant 0 : index
    %c0_36 = arith.constant 0 : index
    %45 = vector.load %arg3[%c2_34, %c0_35, %c0_36] : memref<3x256x128xbf16, #tpu.memory_space<vmem>>, vector<1x256x128xbf16>
    %46 = vector.shape_cast %45 : vector<1x256x128xbf16> to vector<256x128xbf16>
    %cst_37 = arith.constant dense<0.000000e+00> : vector<64x128xf32>
    %47 = tpu.matmul %37, %46, %cst_37 {dimension_numbers = #tpu.dot_dimension_numbers<[1], [0], [0], [1], [0, 0, 1, 1], [], []>} : vector<64x256xbf16>, vector<256x128xbf16>, vector<64x128xf32> -> vector<64x128xf32>
    %48 = arith.addf %44, %47 : vector<64x128xf32>
    %cst_38 = arith.constant 0.000000e+00 : f32
    %49 = vector.broadcast %cst_38 : f32 to vector<64x128xf32>
    %50 = arith.maximumf %48, %49 : vector<64x128xf32>
    %c0_39 = arith.constant 0 : index
    %c0_40 = arith.constant 0 : index
    %51 = vector.load %arg4[%c0_39, %c0_40] : memref<64x128xf32, #tpu.memory_space<vmem>>, vector<64x128xf32>
    tpu.vector_store %arg4[%c0_39, %c0_40], %50 {strides = array<i32>} : memref<64x128xf32, #tpu.memory_space<vmem>>, vector<64x128xf32>,
    return
  }
  func.func @transform_0(%arg0: i32) -> (i32, i32) {
    %c0_i32 = arith.constant 0 : i32
    %c0_i32_0 = arith.constant 0 : i32
    %c0_i32_1 = arith.constant 0 : i32
    return %c0_i32, %c0_i32_0 : i32, i32
  }
  func.func @transform_1(%arg0: i32) -> (i32, i32, i32) {
    %c0_i32 = arith.constant 0 : i32
    %c0_i32_0 = arith.constant 0 : i32
    %c0_i32_1 = arith.constant 0 : i32
    %c0_i32_2 = arith.constant 0 : i32
    return %c0_i32, %c0_i32_0, %c0_i32_1 : i32, i32, i32
  }
  func.func @transform_2(%arg0: i32) -> (i32, i32, i32) {
    %c0_i32 = arith.constant 0 : i32
    %c0_i32_0 = arith.constant 0 : i32
    %c0_i32_1 = arith.constant 0 : i32
    %c0_i32_2 = arith.constant 0 : i32
    return %c0_i32, %c0_i32_0, %c0_i32_1 : i32, i32, i32
  }
  func.func @transform_3(%arg0: i32) -> (i32, i32) {
    %c0_i32 = arith.constant 0 : i32
    %c0_i32_0 = arith.constant 0 : i32
    %c0_i32_1 = arith.constant 0 : i32
    return %c0_i32, %c0_i32_0 : i32, i32
  }
}

</mosaic_0001>

<llo_original>
// kernel: a_call__.1
$region0: #{a_call__.1}
  #allocation0 [shape = 'u32[]', space=smem, size = 0x4, offset = 0x4, fixed_abs, tag = 'smem constant byte address 0x4 - core index']
  #allocation1 [shape = 'u32[144,128]{1,0:T(1,128)}', space=vmem, size = 0x12000, scoped, tag = 'internal scratch']
  #allocation2 [shape = 'f32[72,256]{1,0:T(8,128)}', space=vmem, size = 0x12000, scoped, tag = 'scratch operand']
  %s0 = inlined_call_operand.vmem [shape: f32[72,128], index: 0, kind: input, shape index: {}]
  %s1 = inlined_call_operand.vmem [shape: bf16[3,128,256], index: 1, kind: input, shape index: {}]
  %s2 = inlined_call_operand.vmem [shape: bf16[3,256,128], index: 2, kind: input, shape index: {}]
  %s3 = inlined_call_operand.vmem [shape: f32[64,128], index: 3, kind: output, shape index: {}]
  %s4 = sld [smem:[#allocation0]]
  $region22: #{a_call__.1} parent=0
    _
  %s6 = ssub.s32 1, %s4
  %s7 = scalar_select 0, %s6, %s4
  // Predicated region
  $region2: #{a_call__.1} parent=0 // pred_check
    _
  $region3: #{a_call__.1} parent=0 // pred_check_branch
    %9 = sbr.rel (0) target = $region5
  $region4: #{a_call__.1} parent=0 // pred_region
    _
  $region5: #{a_call__.1} parent=0 // pred_fallthru
    _
  // Predicated region
  $region6: #{a_call__.1} parent=0 // pred_check
    _
  $region7: #{a_call__.1} parent=0 // pred_check_branch
    %11 = sbr.rel (0) target = $region9
  $region8: #{a_call__.1} parent=0 // pred_region
    _
  $region9: #{a_call__.1} parent=0 // pred_fallthru
    _
  // Predicated region
  $region10: #{a_call__.1} parent=0 // pred_check
    _
  $region11: #{a_call__.1} parent=0 // pred_check_branch
    %13 = sbr.rel (0) target = $region13
  $region12: #{a_call__.1} parent=0 // pred_region
    _
  $region13: #{a_call__.1} parent=0 // pred_fallthru
    _
  %15 = vst [vmem:[#allocation2 + $0x80] sm:$0xff] 0.0
  %16 = vst [vmem:[#allocation2 + $0x88] sm:$0xff] 0.0
  %v17 = vld [vmem:[%s0] sm:$0xff]
  %v18 = vld [vmem:[%s0 + $0x8] sm:$0xff]
  %v19 = vld [vmem:[%s0 + $0x10] sm:$0xff]
  %v20 = vld [vmem:[%s0 + $0x18] sm:$0xff]
  %v21 = vld [vmem:[%s0 + $0x20] sm:$0xff]
  %v22 = vld [vmem:[%s0 + $0x28] sm:$0xff]
  %v23 = vld [vmem:[%s0 + $0x30] sm:$0xff]
  %v24 = vld [vmem:[%s0 + $0x38] sm:$0xff]
  %v25 = vpack.c.bf16 %v18, %v17
  %v26 = vpack.c.bf16 %v20, %v19
  %v27 = vpack.c.bf16 %v22, %v21
  %v28 = vpack.c.bf16 %v24, %v23
  %v29 = vld [vmem:[%s0 + $0x1] sm:$0xff]
  %v30 = vld [vmem:[%s0 + $0x9] sm:$0xff]
  %v31 = vld [vmem:[%s0 + $0x11] sm:$0xff]
  %v32 = vld [vmem:[%s0 + $0x19] sm:$0xff]
  %v33 = vld [vmem:[%s0 + $0x21] sm:$0xff]
  %v34 = vld [vmem:[%s0 + $0x29] sm:$0xff]
  %v35 = vld [vmem:[%s0 + $0x31] sm:$0xff]
  %v36 = vld [vmem:[%s0 + $0x39] sm:$0xff]
  %v37 = vpack.c.bf16 %v30, %v29
  %v38 = vpack.c.bf16 %v32, %v31
  %v39 = vpack.c.bf16 %v34, %v33
  %v40 = vpack.c.bf16 %v36, %v35
  %v41 = vld [vmem:[%s0 + $0x2] sm:$0xff]
  %v42 = vld [vmem:[%s0 + $0xa] sm:$0xff]
  %v43 = vld [vmem:[%s0 + $0x12] sm:$0xff]
  %v44 = vld [vmem:[%s0 + $0x1a] sm:$0xff]
  %v45 = vld [vmem:[%s0 + $0x22] sm:$0xff]
  %v46 = vld [vmem:[%s0 + $0x2a] sm:$0xff]
  %v47 = vld [vmem:[%s0 + $0x32] sm:$0xff]
  %v48 = vld [vmem:[%s0 + $0x3a] sm:$0xff]
  %v49 = vpack.c.bf16 %v42, %v41
  %v50 = vpack.c.bf16 %v44, %v43
  %v51 = vpack.c.bf16 %v46, %v45
  %v52 = vpack.c.bf16 %v48, %v47
  %v53 = vld [vmem:[%s1] sm:$0xff]
  %v54 = vld [vmem:[%s1 + $0x8] sm:$0xff]
  %v55 = vld [vmem:[%s1 + $0x10] sm:$0xff]
  %v56 = vld [vmem:[%s1 + $0x18] sm:$0xff]
  %v57 = vld [vmem:[%s1 + $0x20] sm:$0xff]
  %v58 = vld [vmem:[%s1 + $0x28] sm:$0xff]
  %v59 = vld [vmem:[%s1 + $0x30] sm:$0xff]
  %v60 = vld [vmem:[%s1 + $0x38] sm:$0xff]
  %v61 = vld [vmem:[%s1 + $0x40] sm:$0xff]
  %v62 = vld [vmem:[%s1 + $0x48] sm:$0xff]
  %v63 = vld [vmem:[%s1 + $0x50] sm:$0xff]
  %v64 = vld [vmem:[%s1 + $0x58] sm:$0xff]
  %v65 = vld [vmem:[%s1 + $0x60] sm:$0xff]
  %v66 = vld [vmem:[%s1 + $0x68] sm:$0xff]
  %v67 = vld [vmem:[%s1 + $0x70] sm:$0xff]
  %v68 = vld [vmem:[%s1 + $0x78] sm:$0xff]
  %s69 = scalar_lea.vmem %s1, 128
  %v70 = vld [vmem:[%s69] sm:$0xff]
  %v71 = vld [vmem:[%s69 + $0x8] sm:$0xff]
  %v72 = vld [vmem:[%s69 + $0x10] sm:$0xff]
  %v73 = vld [vmem:[%s69 + $0x18] sm:$0xff]
  %v74 = vld [vmem:[%s69 + $0x20] sm:$0xff]
  %v75 = vld [vmem:[%s69 + $0x28] sm:$0xff]
  %v76 = vld [vmem:[%s69 + $0x30] sm:$0xff]
  %v77 = vld [vmem:[%s69 + $0x38] sm:$0xff]
  %v78 = vld [vmem:[%s69 + $0x40] sm:$0xff]
  %v79 = vld [vmem:[%s69 + $0x48] sm:$0xff]
  %v80 = vld [vmem:[%s69 + $0x50] sm:$0xff]
  %v81 = vld [vmem:[%s69 + $0x58] sm:$0xff]
  %v82 = vld [vmem:[%s69 + $0x60] sm:$0xff]
  %v83 = vld [vmem:[%s69 + $0x68] sm:$0xff]
  %v84 = vld [vmem:[%s69 + $0x70] sm:$0xff]
  %v85 = vld [vmem:[%s69 + $0x78] sm:$0xff]
  %v102 = vunpack.c.l.b16 %v70
  %v103 = vunpack.c.h.b16 %v70
  %v104 = vunpack.c.l.b16 %v71
  %v105 = vunpack.c.h.b16 %v71
  %v106 = vunpack.c.l.b16 %v72
  %v107 = vunpack.c.h.b16 %v72
  %v108 = vunpack.c.l.b16 %v73
  %v109 = vunpack.c.h.b16 %v73
  %v110 = vunpack.c.l.b16 %v74
  %v111 = vunpack.c.h.b16 %v74
  %v112 = vunpack.c.l.b16 %v75
  %v113 = vunpack.c.h.b16 %v75
  %v114 = vunpack.c.l.b16 %v76
  %v115 = vunpack.c.h.b16 %v76
  %v116 = vunpack.c.l.b16 %v77
  %v117 = vunpack.c.h.b16 %v77
  %v118 = vunpack.c.l.b16 %v78
  %v119 = vunpack.c.h.b16 %v78
  %v120 = vunpack.c.l.b16 %v79
  %v121 = vunpack.c.h.b16 %v79
  %v122 = vunpack.c.l.b16 %v80
  %v123 = vunpack.c.h.b16 %v80
  %v124 = vunpack.c.l.b16 %v81
  %v125 = vunpack.c.h.b16 %v81
  %v126 = vunpack.c.l.b16 %v82
  %v127 = vunpack.c.h.b16 %v82
  %v128 = vunpack.c.l.b16 %v83
  %v129 = vunpack.c.h.b16 %v83
  %v130 = vunpack.c.l.b16 %v84
  %v131 = vunpack.c.h.b16 %v84
  %v132 = vunpack.c.l.b16 %v85
  %v133 = vunpack.c.h.b16 %v85
  %v134 = vpack.c.b16 %v104, %v102
  %v135 = vpack.c.b16 %v105, %v103
  %v136 = vpack.c.b16 %v108, %v106
  %v137 = vpack.c.b16 %v109, %v107
  %v138 = vpack.c.b16 %v112, %v110
  %v139 = vpack.c.b16 %v113, %v111
  %v140 = vpack.c.b16 %v116, %v114
  %v141 = vpack.c.b16 %v117, %v115
  %v142 = vpack.c.b16 %v120, %v118
  %v143 = vpack.c.b16 %v121, %v119
  %v144 = vpack.c.b16 %v124, %v122
  %v145 = vpack.c.b16 %v125, %v123
  %v146 = vpack.c.b16 %v128, %v126
  %v147 = vpack.c.b16 %v129, %v127
  %v148 = vpack.c.b16 %v132, %v130
  %v149 = vpack.c.b16 %v133, %v131
  %166 = vmatprep.subr.bf16.mxu0 %v135
  %167 = vmatpush1.bf16.msra.mxu0 %v134
  %168 = vmatprep.subr.bf16.mxu0 %v137
  %169 = vmatpush1.bf16.msra.mxu0 %v136
  %170 = vmatprep.subr.bf16.mxu0 %v139
  %171 = vmatpush1.bf16.msra.mxu0 %v138
  %172 = vmatprep.subr.bf16.mxu0 %v141
  %173 = vmatpush1.bf16.msra.mxu0 %v140
  %174 = vmatprep.subr.bf16.mxu0 %v143
  %175 = vmatpush1.bf16.msra.mxu0 %v142
  %176 = vmatprep.subr.bf16.mxu0 %v145
  %177 = vmatpush1.bf16.msra.mxu0 %v144
  %178 = vmatprep.subr.bf16.mxu0 %v147
  %179 = vmatpush1.bf16.msra.mxu0 %v146
  %180 = vmatprep.subr.bf16.mxu0 %v149
  %181 = vmatpush1.bf16.msra.mxu0 %v148
  %182 = vmatprep.subr.bf16.mxu0 0
  %183 = vmatpush1.bf16.msra.mxu0 0
  %184 = vmatprep.subr.bf16.mxu0 0
  %185 = vmatpush1.bf16.msra.mxu0 0
  %186 = vmatprep.subr.bf16.mxu0 0
  %187 = vmatpush1.bf16.msra.mxu0 0
  %188 = vmatprep.subr.bf16.mxu0 0
  %189 = vmatpush1.bf16.msra.mxu0 0
  %190 = vmatprep.subr.bf16.mxu0 0
  %191 = vmatpush1.bf16.msra.mxu0 0
  %192 = vmatprep.subr.bf16.mxu0 0
  %193 = vmatpush1.bf16.msra.mxu0 0
  %194 = vmatprep.subr.bf16.mxu0 0
  %195 = vmatpush1.bf16.msra.mxu0 0
  %196 = vmatprep.subr.bf16.mxu0 0
  %197 = vmatpush1.bf16.msra.mxu0 0
  %198 = vmatprep.mubr.bf16.mxu0 0
  %199 = vmatmul.mubr.bf16.gmra.mrb[0].mxu0 %v37
  %v200 = vpop.f32.mrb[0].mxu0
  %v201 = vadd.f32 0.0, %v200
  %v202 = vpop.f32.mrb[0].mxu0
  %v203 = vadd.f32 0.0, %v202
  %v204 = vpop.f32.mrb[0].mxu0
  %v205 = vadd.f32 0.0, %v204
  %v206 = vpop.f32.mrb[0].mxu0
  %v207 = vadd.f32 0.0, %v206
  %208 = vmatprep.mubr.bf16.mxu0 0
  %209 = vmatmul.mubr.bf16.gmra.mrb[0].mxu0 %v38
  %v210 = vpop.f32.mrb[0].mxu0
  %v211 = vadd.f32 0.0, %v210
  %v212 = vpop.f32.mrb[0].mxu0
  %v213 = vadd.f32 0.0, %v212
  %v214 = vpop.f32.mrb[0].mxu0
  %v215 = vadd.f32 0.0, %v214
  %v216 = vpop.f32.mrb[0].mxu0
  %v217 = vadd.f32 0.0, %v216
  %218 = vmatprep.mubr.bf16.mxu0 0
  %219 = vmatmul.mubr.bf16.gmra.mrb[0].mxu0 %v39
  %v220 = vpop.f32.mrb[0].mxu0
  %v221 = vadd.f32 0.0, %v220
  %v222 = vpop.f32.mrb[0].mxu0
  %v223 = vadd.f32 0.0, %v222
  %v224 = vpop.f32.mrb[0].mxu0
  %v225 = vadd.f32 0.0, %v224
  %v226 = vpop.f32.mrb[0].mxu0
  %v227 = vadd.f32 0.0, %v226
  %228 = vmatprep.mubr.bf16.mxu0 0
  %229 = vmatmul.mubr.bf16.gmra.mrb[0].mxu0 %v40
  %v230 = vpop.f32.mrb[0].mxu0
  %v231 = vadd.f32 0.0, %v230
  %v232 = vpop.f32.mrb[0].mxu0
  %v233 = vadd.f32 0.0, %v232
  %v234 = vpop.f32.mrb[0].mxu0
  %v235 = vadd.f32 0.0, %v234
  %v236 = vpop.f32.mrb[0].mxu0
  %v237 = vadd.f32 0.0, %v236
  %238 = vdwg.mxu0
  %v255 = vunpack.c.l.b16 %v53
  %v256 = vunpack.c.h.b16 %v53
  %v257 = vunpack.c.l.b16 %v54
  %v258 = vunpack.c.h.b16 %v54
  %v259 = vunpack.c.l.b16 %v55
  %v260 = vunpack.c.h.b16 %v55
  %v261 = vunpack.c.l.b16 %v56
  %v262 = vunpack.c.h.b16 %v56
  %v263 = vunpack.c.l.b16 %v57
  %v264 = vunpack.c.h.b16 %v57
  %v265 = vunpack.c.l.b16 %v58
  %v266 = vunpack.c.h.b16 %v58
  %v267 = vunpack.c.l.b16 %v59
  %v268 = vunpack.c.h.b16 %v59
  %v269 = vunpack.c.l.b16 %v60
  %v270 = vunpack.c.h.b16 %v60
  %v271 = vunpack.c.l.b16 %v61
  %v272 = vunpack.c.h.b16 %v61
  %v273 = vunpack.c.l.b16 %v62
  %v274 = vunpack.c.h.b16 %v62
  %v275 = vunpack.c.l.b16 %v63
  %v276 = vunpack.c.h.b16 %v63
  %v277 = vunpack.c.l.b16 %v64
  %v278 = vunpack.c.h.b16 %v64
  %v279 = vunpack.c.l.b16 %v65
  %v280 = vunpack.c.h.b16 %v65
  %v281 = vunpack.c.l.b16 %v66
  %v282 = vunpack.c.h.b16 %v66
  %v283 = vunpack.c.l.b16 %v67
  %v284 = vunpack.c.h.b16 %v67
  %v285 = vunpack.c.l.b16 %v68
  %v286 = vunpack.c.h.b16 %v68
  %v287 = vpack.c.b16 %v257, %v255
  %v288 = vpack.c.b16 %v258, %v256
  %v289 = vpack.c.b16 %v261, %v259
  %v290 = vpack.c.b16 %v262, %v260
  %v291 = vpack.c.b16 %v265, %v263
  %v292 = vpack.c.b16 %v266, %v264
  %v293 = vpack.c.b16 %v269, %v267
  %v294 = vpack.c.b16 %v270, %v268
  %v295 = vpack.c.b16 %v273, %v271
  %v296 = vpack.c.b16 %v274, %v272
  %v297 = vpack.c.b16 %v277, %v275
  %v298 = vpack.c.b16 %v278, %v276
  %v299 = vpack.c.b16 %v281, %v279
  %v300 = vpack.c.b16 %v282, %v280
  %v301 = vpack.c.b16 %v285, %v283
  %v302 = vpack.c.b16 %v286, %v284
  %319 = vmatprep.subr.bf16.mxu0 %v288
  %320 = vmatpush1.bf16.msra.mxu0 %v287
  %321 = vmatprep.subr.bf16.mxu0 %v290
  %322 = vmatpush1.bf16.msra.mxu0 %v289
  %323 = vmatprep.subr.bf16.mxu0 %v292
  %324 = vmatpush1.bf16.msra.mxu0 %v291
  %325 = vmatprep.subr.bf16.mxu0 %v294
  %326 = vmatpush1.bf16.msra.mxu0 %v293
  %327 = vmatprep.subr.bf16.mxu0 %v296
  %328 = vmatpush1.bf16.msra.mxu0 %v295
  %329 = vmatprep.subr.bf16.mxu0 %v298
  %330 = vmatpush1.bf16.msra.mxu0 %v297
  %331 = vmatprep.subr.bf16.mxu0 %v300
  %332 = vmatpush1.bf16.msra.mxu0 %v299
  %333 = vmatprep.subr.bf16.mxu0 %v302
  %334 = vmatpush1.bf16.msra.mxu0 %v301
  %335 = vmatprep.subr.bf16.mxu0 0
  %336 = vmatpush1.bf16.msra.mxu0 0
  %337 = vmatprep.subr.bf16.mxu0 0
  %338 = vmatpush1.bf16.msra.mxu0 0
  %339 = vmatprep.subr.bf16.mxu0 0
  %340 = vmatpush1.bf16.msra.mxu0 0
  %341 = vmatprep.subr.bf16.mxu0 0
  %342 = vmatpush1.bf16.msra.mxu0 0
  %343 = vmatprep.subr.bf16.mxu0 0
  %344 = vmatpush1.bf16.msra.mxu0 0
  %345 = vmatprep.subr.bf16.mxu0 0
  %346 = vmatpush1.bf16.msra.mxu0 0
  %347 = vmatprep.subr.bf16.mxu0 0
  %348 = vmatpush1.bf16.msra.mxu0 0
  %349 = vmatprep.subr.bf16.mxu0 0
  %350 = vmatpush1.bf16.msra.mxu0 0
  %351 = vmatprep.mubr.bf16.mxu0 0
  %352 = vmatmul.mubr.bf16.gmra.mrb[0].mxu0 %v25
  %v353 = vpop.f32.mrb[0].mxu0
  %v354 = vadd.f32 %v201, %v353
  %v355 = vpop.f32.mrb[0].mxu0
  %v356 = vadd.f32 %v203, %v355
  %v357 = vpop.f32.mrb[0].mxu0
  %v358 = vadd.f32 %v205, %v357
  %v359 = vpop.f32.mrb[0].mxu0
  %v360 = vadd.f32 %v207, %v359
  %361 = vmatprep.mubr.bf16.mxu0 0
  %362 = vmatmul.mubr.bf16.gmra.mrb[0].mxu0 %v26
  %v363 = vpop.f32.mrb[0].mxu0
  %v364 = vadd.f32 %v211, %v363
  %v365 = vpop.f32.mrb[0].mxu0
  %v366 = vadd.f32 %v213, %v365
  %v367 = vpop.f32.mrb[0].mxu0
  %v368 = vadd.f32 %v215, %v367
  %v369 = vpop.f32.mrb[0].mxu0
  %v370 = vadd.f32 %v217, %v369
  %371 = vmatprep.mubr.bf16.mxu0 0
  %372 = vmatmul.mubr.bf16.gmra.mrb[0].mxu0 %v27
  %v373 = vpop.f32.mrb[0].mxu0
  %v374 = vadd.f32 %v221, %v373
  %v375 = vpop.f32.mrb[0].mxu0
  %v376 = vadd.f32 %v223, %v375
  %v377 = vpop.f32.mrb[0].mxu0
  %v378 = vadd.f32 %v225, %v377
  %v379 = vpop.f32.mrb[0].mxu0
  %v380 = vadd.f32 %v227, %v379
  %381 = vmatprep.mubr.bf16.mxu0 0
  %382 = vmatmul.mubr.bf16.gmra.mrb[0].mxu0 %v28
  %v383 = vpop.f32.mrb[0].mxu0
  %v384 = vadd.f32 %v231, %v383
  %v385 = vpop.f32.mrb[0].mxu0
  %v386 = vadd.f32 %v233, %v385
  %v387 = vpop.f32.mrb[0].mxu0
  %v388 = vadd.f32 %v235, %v387
  %v389 = vpop.f32.mrb[0].mxu0
  %v390 = vadd.f32 %v237, %v389
  %391 = vdwg.mxu0
  %s392 = scalar_lea.vmem %s1, 256
  %v393 = vld [vmem:[%s392] sm:$0xff]
  %v394 = vld [vmem:[%s392 + $0x8] sm:$0xff]
  %v395 = vld [vmem:[%s392 + $0x10] sm:$0xff]
  %v396 = vld [vmem:[%s392 + $0x18] sm:$0xff]
  %v397 = vld [vmem:[%s392 + $0x20] sm:$0xff]
  %v398 = vld [vmem:[%s392 + $0x28] sm:$0xff]
  %v399 = vld [vmem:[%s392 + $0x30] sm:$0xff]
  %v400 = vld [vmem:[%s392 + $0x38] sm:$0xff]
  %v401 = vld [vmem:[%s392 + $0x40] sm:$0xff]
  %v402 = vld [vmem:[%s392 + $0x48] sm:$0xff]
  %v403 = vld [vmem:[%s392 + $0x50] sm:$0xff]
  %v404 = vld [vmem:[%s392 + $0x58] sm:$0xff]
  %v405 = vld [vmem:[%s392 + $0x60] sm:$0xff]
  %v406 = vld [vmem:[%s392 + $0x68] sm:$0xff]
  %v407 = vld [vmem:[%s392 + $0x70] sm:$0xff]
  %v408 = vld [vmem:[%s392 + $0x78] sm:$0xff]
  %v425 = vunpack.c.l.b16 %v393
  %v426 = vunpack.c.h.b16 %v393
  %v427 = vunpack.c.l.b16 %v394
  %v428 = vunpack.c.h.b16 %v394
  %v429 = vunpack.c.l.b16 %v395
  %v430 = vunpack.c.h.b16 %v395
  %v431 = vunpack.c.l.b16 %v396
  %v432 = vunpack.c.h.b16 %v396
  %v433 = vunpack.c.l.b16 %v397
  %v434 = vunpack.c.h.b16 %v397
  %v435 = vunpack.c.l.b16 %v398
  %v436 = vunpack.c.h.b16 %v398
  %v437 = vunpack.c.l.b16 %v399
  %v438 = vunpack.c.h.b16 %v399
  %v439 = vunpack.c.l.b16 %v400
  %v440 = vunpack.c.h.b16 %v400
  %v441 = vunpack.c.l.b16 %v401
  %v442 = vunpack.c.h.b16 %v401
  %v443 = vunpack.c.l.b16 %v402
  %v444 = vunpack.c.h.b16 %v402
  %v445 = vunpack.c.l.b16 %v403
  %v446 = vunpack.c.h.b16 %v403
  %v447 = vunpack.c.l.b16 %v404
  %v448 = vunpack.c.h.b16 %v404
  %v449 = vunpack.c.l.b16 %v405
  %v450 = vunpack.c.h.b16 %v405
  %v451 = vunpack.c.l.b16 %v406
  %v452 = vunpack.c.h.b16 %v406
  %v453 = vunpack.c.l.b16 %v407
  %v454 = vunpack.c.h.b16 %v407
  %v455 = vunpack.c.l.b16 %v408
  %v456 = vunpack.c.h.b16 %v408
  %v457 = vpack.c.b16 %v427, %v425
  %v458 = vpack.c.b16 %v428, %v426
  %v459 = vpack.c.b16 %v431, %v429
  %v460 = vpack.c.b16 %v432, %v430
  %v461 = vpack.c.b16 %v435, %v433
  %v462 = vpack.c.b16 %v436, %v434
  %v463 = vpack.c.b16 %v439, %v437
  %v464 = vpack.c.b16 %v440, %v438
  %v465 = vpack.c.b16 %v443, %v441
  %v466 = vpack.c.b16 %v444, %v442
  %v467 = vpack.c.b16 %v447, %v445
  %v468 = vpack.c.b16 %v448, %v446
  %v469 = vpack.c.b16 %v451, %v449
  %v470 = vpack.c.b16 %v452, %v450
  %v471 = vpack.c.b16 %v455, %v453
  %v472 = vpack.c.b16 %v456, %v454
  %489 = vmatprep.subr.bf16.mxu0 %v458
  %490 = vmatpush1.bf16.msra.mxu0 %v457
  %491 = vmatprep.subr.bf16.mxu0 %v460
  %492 = vmatpush1.bf16.msra.mxu0 %v459
  %493 = vmatprep.subr.bf16.mxu0 %v462
  %494 = vmatpush1.bf16.msra.mxu0 %v461
  %495 = vmatprep.subr.bf16.mxu0 %v464
  %496 = vmatpush1.bf16.msra.mxu0 %v463
  %497 = vmatprep.subr.bf16.mxu0 %v466
  %498 = vmatpush1.bf16.msra.mxu0 %v465
  %499 = vmatprep.subr.bf16.mxu0 %v468
  %500 = vmatpush1.bf16.msra.mxu0 %v467
  %501 = vmatprep.subr.bf16.mxu0 %v470
  %502 = vmatpush1.bf16.msra.mxu0 %v469
  %503 = vmatprep.subr.bf16.mxu0 %v472
  %504 = vmatpush1.bf16.msra.mxu0 %v471
  %505 = vmatprep.subr.bf16.mxu0 0
  %506 = vmatpush1.bf16.msra.mxu0 0
  %507 = vmatprep.subr.bf16.mxu0 0
  %508 = vmatpush1.bf16.msra.mxu0 0
  %509 = vmatprep.subr.bf16.mxu0 0
  %510 = vmatpush1.bf16.msra.mxu0 0
  %511 = vmatprep.subr.bf16.mxu0 0
  %512 = vmatpush1.bf16.msra.mxu0 0
  %513 = vmatprep.subr.bf16.mxu0 0
  %514 = vmatpush1.bf16.msra.mxu0 0
  %515 = vmatprep.subr.bf16.mxu0 0
  %516 = vmatpush1.bf16.msra.mxu0 0
  %517 = vmatprep.subr.bf16.mxu0 0
  %518 = vmatpush1.bf16.msra.mxu0 0
  %519 = vmatprep.subr.bf16.mxu0 0
  %520 = vmatpush1.bf16.msra.mxu0 0
  %521 = vmatprep.mubr.bf16.mxu0 0
  %522 = vmatmul.mubr.bf16.gmra.mrb[0].mxu0 %v49
  %v523 = vpop.f32.mrb[0].mxu0
  %v524 = vadd.f32 0.0, %v523
  %v525 = vpop.f32.mrb[0].mxu0
  %v526 = vadd.f32 0.0, %v525
  %v527 = vpop.f32.mrb[0].mxu0
  %v528 = vadd.f32 0.0, %v527
  %v529 = vpop.f32.mrb[0].mxu0
  %v530 = vadd.f32 0.0, %v529
  %531 = vmatprep.mubr.bf16.mxu0 0
  %532 = vmatmul.mubr.bf16.gmra.mrb[0].mxu0 %v50
  %v533 = vpop.f32.mrb[0].mxu0
  %v534 = vadd.f32 0.0, %v533
  %v535 = vpop.f32.mrb[0].mxu0
  %v536 = vadd.f32 0.0, %v535
  %v537 = vpop.f32.mrb[0].mxu0
  %v538 = vadd.f32 0.0, %v537
  %v539 = vpop.f32.mrb[0].mxu0
  %v540 = vadd.f32 0.0, %v539
  %541 = vmatprep.mubr.bf16.mxu0 0
  %542 = vmatmul.mubr.bf16.gmra.mrb[0].mxu0 %v51
  %v543 = vpop.f32.mrb[0].mxu0
  %v544 = vadd.f32 0.0, %v543
  %v545 = vpop.f32.mrb[0].mxu0
  %v546 = vadd.f32 0.0, %v545
  %v547 = vpop.f32.mrb[0].mxu0
  %v548 = vadd.f32 0.0, %v547
  %v549 = vpop.f32.mrb[0].mxu0
  %v550 = vadd.f32 0.0, %v549
  %551 = vmatprep.mubr.bf16.mxu0 0
  %552 = vmatmul.mubr.bf16.gmra.mrb[0].mxu0 %v52
  %v553 = vpop.f32.mrb[0].mxu0
  %v554 = vadd.f32 0.0, %v553
  %v555 = vpop.f32.mrb[0].mxu0
  %v556 = vadd.f32 0.0, %v555
  %v557 = vpop.f32.mrb[0].mxu0
  %v558 = vadd.f32 0.0, %v557
  %v559 = vpop.f32.mrb[0].mxu0
  %v560 = vadd.f32 0.0, %v559
  %561 = vdwg.mxu0
  %v562 = vadd.f32 %v354, %v524
  %v563 = vadd.f32 %v356, %v526
  %v564 = vadd.f32 %v358, %v528
  %v565 = vadd.f32 %v360, %v530
  %v566 = vadd.f32 %v364, %v534
  %v567 = vadd.f32 %v366, %v536
  %v568 = vadd.f32 %v368, %v538
  %v569 = vadd.f32 %v370, %v540
  %v570 = vadd.f32 %v374, %v544
  %v571 = vadd.f32 %v376, %v546
  %v572 = vadd.f32 %v378, %v548
  %v573 = vadd.f32 %v380, %v550
  %v574 = vadd.f32 %v384, %v554
  %v575 = vadd.f32 %v386, %v556
  %v576 = vadd.f32 %v388, %v558
  %v577 = vadd.f32 %v390, %v560
  %v578 = vmax.f32 %v562, 0.0
  %v579 = vmax.f32 %v563, 0.0
  %v580 = vmax.f32 %v564, 0.0
  %v581 = vmax.f32 %v565, 0.0
  %v582 = vmax.f32 %v566, 0.0
  %v583 = vmax.f32 %v567, 0.0
  %v584 = vmax.f32 %v568, 0.0
  %v585 = vmax.f32 %v569, 0.0
  %v586 = vmax.f32 %v570, 0.0
  %v587 = vmax.f32 %v571, 0.0
  %v588 = vmax.f32 %v572, 0.0
  %v589 = vmax.f32 %v573, 0.0
  %v590 = vmax.f32 %v574, 0.0
  %v591 = vmax.f32 %v575, 0.0
  %v592 = vmax.f32 %v576, 0.0
  %v593 = vmax.f32 %v577, 0.0
  %v594 = vlaneseq
  %v595 = vshrl.u32 %v594, 7
  %v596 = vadd.s32 %v595, 8
  %v597 = vadd.s32 %v595, 16
  %v598 = vadd.s32 %v595, 24
  %v599 = vadd.s32 %v595, 32
  %v600 = vadd.s32 %v595, 40
  %v601 = vadd.s32 %v595, 48
  %v602 = vadd.s32 %v595, 56
  %v603 = vand.u32 %v595, 31
  %v604 = vand.u32 %v596, 31
  %v605 = vand.u32 %v597, 31
  %v606 = vand.u32 %v598, 31
  %v607 = vand.u32 %v599, 31
  %v608 = vand.u32 %v600, 31
  %v609 = vand.u32 %v601, 31
  %v610 = vand.u32 %v602, 31
  %vm611 = vcmp.ge.s32.totalorder %v603, 1
  %vm612 = vcmp.ge.s32.totalorder %v604, 1
  %vm613 = vcmp.ge.s32.totalorder %v605, 1
  %vm614 = vcmp.ge.s32.totalorder %v606, 1
  %vm615 = vcmp.ge.s32.totalorder %v607, 1
  %vm616 = vcmp.ge.s32.totalorder %v608, 1
  %vm617 = vcmp.ge.s32.totalorder %v609, 1
  %vm618 = vcmp.ge.s32.totalorder %v610, 1
  %vm619 = vcmp.lt.s32.totalorder %v603, 17
  %vm620 = vcmp.lt.s32.totalorder %v604, 17
  %vm621 = vcmp.lt.s32.totalorder %v605, 17
  %vm622 = vcmp.lt.s32.totalorder %v606, 17
  %vm623 = vcmp.lt.s32.totalorder %v607, 17
  %vm624 = vcmp.lt.s32.totalorder %v608, 17
  %vm625 = vcmp.lt.s32.totalorder %v609, 17
  %vm626 = vcmp.lt.s32.totalorder %v610, 17
  %vm627 = vmand %vm611, %vm619
  %vm628 = vmand %vm612, %vm620
  %vm629 = vmand %vm613, %vm621
  %vm630 = vmand %vm614, %vm622
  %vm631 = vmand %vm615, %vm623
  %vm632 = vmand %vm616, %vm624
  %vm633 = vmand %vm617, %vm625
  %vm634 = vmand %vm618, %vm626
  %v635 = vsel %vm627, %v578, 0.0
  %v636 = vsel %vm627, %v579, 0.0
  %v637 = vsel %vm628, %v580, 0.0
  %v638 = vsel %vm628, %v581, 0.0
  %v639 = vsel %vm629, %v582, 0.0
  %v640 = vsel %vm629, %v583, 0.0
  %v641 = vsel %vm630, %v584, 0.0
  %v642 = vsel %vm630, %v585, 0.0
  %v643 = vsel %vm631, %v586, 0.0
  %v644 = vsel %vm631, %v587, 0.0
  %v645 = vsel %vm632, %v588, 0.0
  %v646 = vsel %vm632, %v589, 0.0
  %v647 = vsel %vm633, %v590, 0.0
  %v648 = vsel %vm633, %v591, 0.0
  %v649 = vsel %vm634, %v592, 0.0
  %v650 = vsel %vm634, %v593, 0.0
  %651 = vst [vmem:[#allocation2] sm:$0xff] %v635
  %652 = vst [vmem:[#allocation2 + $0x8] sm:$0xff] %v636
  %653 = vst [vmem:[#allocation2 + $0x10] sm:$0xff] %v637
  %654 = vst [vmem:[#allocation2 + $0x18] sm:$0xff] %v638
  %655 = vst [vmem:[#allocation2 + $0x20] sm:$0xff] %v639
  %656 = vst [vmem:[#allocation2 + $0x28] sm:$0xff] %v640
  %657 = vst [vmem:[#allocation2 + $0x30] sm:$0xff] %v641
  %658 = vst [vmem:[#allocation2 + $0x38] sm:$0xff] %v642
  %659 = vst [vmem:[#allocation2 + $0x40] sm:$0xff] %v643
  %660 = vst [vmem:[#allocation2 + $0x48] sm:$0xff] %v644
  %661 = vst [vmem:[#allocation2 + $0x50] sm:$0xff] %v645
  %662 = vst [vmem:[#allocation2 + $0x58] sm:$0xff] %v646
  %663 = vst [vmem:[#allocation2 + $0x60] sm:$0xff] %v647
  %664 = vst [vmem:[#allocation2 + $0x68] sm:$0xff] %v648
  %665 = vst [vmem:[#allocation2 + $0x70] sm:$0xff] %v649
  %666 = vst [vmem:[#allocation2 + $0x78] sm:$0xff] %v650
  %v667 = vld [vmem:[#allocation2] sm:$0xff]
  %v668 = vld [vmem:[#allocation2 + $0x8] sm:$0xff]
  %v669 = vld [vmem:[#allocation2 + $0x10] sm:$0xff]
  %v670 = vld [vmem:[#allocation2 + $0x18] sm:$0xff]
  %v671 = vld [vmem:[#allocation2 + $0x20] sm:$0xff]
  %v672 = vld [vmem:[#allocation2 + $0x28] sm:$0xff]
  %v673 = vld [vmem:[#allocation2 + $0x30] sm:$0xff]
  %v674 = vld [vmem:[#allocation2 + $0x38] sm:$0xff]
  %v675 = vld [vmem:[#allocation2 + $0x40] sm:$0xff]
  %v676 = vld [vmem:[#allocation2 + $0x48] sm:$0xff]
  %v677 = vld [vmem:[#allocation2 + $0x50] sm:$0xff]
  %v678 = vld [vmem:[#allocation2 + $0x58] sm:$0xff]
  %v679 = vld [vmem:[#allocation2 + $0x60] sm:$0xff]
  %v680 = vld [vmem:[#allocation2 + $0x68] sm:$0xff]
  %v681 = vld [vmem:[#allocation2 + $0x70] sm:$0xff]
  %v682 = vld [vmem:[#allocation2 + $0x78] sm:$0xff]
  %v683 = vpack.c.bf16 %v669, %v667
  %v684 = vpack.c.bf16 %v670, %v668
  %v685 = vpack.c.bf16 %v673, %v671
  %v686 = vpack.c.bf16 %v674, %v672
  %v687 = vpack.c.bf16 %v677, %v675
  %v688 = vpack.c.bf16 %v678, %v676
  %v689 = vpack.c.bf16 %v681, %v679
  %v690 = vpack.c.bf16 %v682, %v680
  %v691 = vld [vmem:[#allocation2] sm:$0xfe]
  %v692 = vld [vmem:[#allocation2 + $0x8] sm:$0xfe]
  %v693 = vld [vmem:[#allocation2 + $0x10] sm:$0xff]
  %v694 = vld [vmem:[#allocation2 + $0x18] sm:$0xff]
  %v695 = vld [vmem:[#allocation2 + $0x20] sm:$0xff]
  %v696 = vld [vmem:[#allocation2 + $0x28] sm:$0xff]
  %v697 = vld [vmem:[#allocation2 + $0x30] sm:$0xff]
  %v698 = vld [vmem:[#allocation2 + $0x38] sm:$0xff]
  %v699 = vld [vmem:[#allocation2 + $0x40] sm:$0xff]
  %v700 = vld [vmem:[#allocation2 + $0x48] sm:$0xff]
  %v701 = vld [vmem:[#allocation2 + $0x50] sm:$0xff]
  %v702 = vld [vmem:[#allocation2 + $0x58] sm:$0xff]
  %v703 = vld [vmem:[#allocation2 + $0x60] sm:$0xff]
  %v704 = vld [vmem:[#allocation2 + $0x68] sm:$0xff]
  %v705 = vld [vmem:[#allocation2 + $0x70] sm:$0xff]
  %v706 = vld [vmem:[#allocation2 + $0x78] sm:$0xff]
  %v707 = vld [vmem:[#allocation2 + $0x80] sm:$0x1]
  %v708 = vld [vmem:[#allocation2 + $0x88] sm:$0x1]
  %v709 = vpack.c.bf16 %v693, %v691
  %v710 = vpack.c.bf16 %v694, %v692
  %v711 = vpack.c.bf16 %v697, %v695
  %v712 = vpack.c.bf16 %v698, %v696
  %v713 = vpack.c.bf16 %v701, %v699
  %v714 = vpack.c.bf16 %v702, %v700
  %v715 = vpack.c.bf16 %v705, %v703
  %v716 = vpack.c.bf16 %v706, %v704
  %v717 = vpack.c.bf16 %v707, %v707
  %v718 = vpack.c.bf16 %v708, %v708
  %v719 = vld [vmem:[#allocation2] sm:$0xfc]
  %v720 = vld [vmem:[#allocation2 + $0x8] sm:$0xfc]
  %v721 = vld [vmem:[#allocation2 + $0x80] sm:$0x3]
  %v722 = vld [vmem:[#allocation2 + $0x88] sm:$0x3]
  %v723 = vpack.c.bf16 %v693, %v719
  %v724 = vpack.c.bf16 %v694, %v720
  %v725 = vpack.c.bf16 %v721, %v721
  %v726 = vpack.c.bf16 %v722, %v722
  %v727 = vld [vmem:[%s2] sm:$0xf]
  %v728 = vld [vmem:[%s2 + $0x4] sm:$0xf]
  %v729 = vld [vmem:[%s2 + $0x8] sm:$0xf]
  %v730 = vld [vmem:[%s2 + $0xc] sm:$0xf]
  %v731 = vld [vmem:[%s2 + $0x10] sm:$0xf]
  %v732 = vld [vmem:[%s2 + $0x14] sm:$0xf]
  %v733 = vld [vmem:[%s2 + $0x18] sm:$0xf]
  %v734 = vld [vmem:[%s2 + $0x1c] sm:$0xf]
  %v735 = vld [vmem:[%s2 + $0x20] sm:$0xf]
  %v736 = vld [vmem:[%s2 + $0x24] sm:$0xf]
  %v737 = vld [vmem:[%s2 + $0x28] sm:$0xf]
  %v738 = vld [vmem:[%s2 + $0x2c] sm:$0xf]
  %v739 = vld [vmem:[%s2 + $0x30] sm:$0xf]
  %v740 = vld [vmem:[%s2 + $0x34] sm:$0xf]
  %v741 = vld [vmem:[%s2 + $0x38] sm:$0xf]
  %v742 = vld [vmem:[%s2 + $0x3c] sm:$0xf]
  %v743 = vld [vmem:[%s2 + $0x40] sm:$0xf]
  %v744 = vld [vmem:[%s2 + $0x44] sm:$0xf]
  %v745 = vld [vmem:[%s2 + $0x48] sm:$0xf]
  %v746 = vld [vmem:[%s2 + $0x4c] sm:$0xf]
  %v747 = vld [vmem:[%s2 + $0x50] sm:$0xf]
  %v748 = vld [vmem:[%s2 + $0x54] sm:$0xf]
  %v749 = vld [vmem:[%s2 + $0x58] sm:$0xf]
  %v750 = vld [vmem:[%s2 + $0x5c] sm:$0xf]
  %v751 = vld [vmem:[%s2 + $0x60] sm:$0xf]
  %v752 = vld [vmem:[%s2 + $0x64] sm:$0xf]
  %v753 = vld [vmem:[%s2 + $0x68] sm:$0xf]
  %v754 = vld [vmem:[%s2 + $0x6c] sm:$0xf]
  %v755 = vld [vmem:[%s2 + $0x70] sm:$0xf]
  %v756 = vld [vmem:[%s2 + $0x74] sm:$0xf]
  %v757 = vld [vmem:[%s2 + $0x78] sm:$0xf]
  %v758 = vld [vmem:[%s2 + $0x7c] sm:$0xf]
  %s759 = scalar_lea.vmem %s2, 128
  %v760 = vld [vmem:[%s759] sm:$0xf]
  %v761 = vld [vmem:[%s759 + $0x4] sm:$0xf]
  %v762 = vld [vmem:[%s759 + $0x8] sm:$0xf]
  %v763 = vld [vmem:[%s759 + $0xc] sm:$0xf]
  %v764 = vld [vmem:[%s759 + $0x10] sm:$0xf]
  %v765 = vld [vmem:[%s759 + $0x14] sm:$0xf]
  %v766 = vld [vmem:[%s759 + $0x18] sm:$0xf]
  %v767 = vld [vmem:[%s759 + $0x1c] sm:$0xf]
  %v768 = vld [vmem:[%s759 + $0x20] sm:$0xf]
  %v769 = vld [vmem:[%s759 + $0x24] sm:$0xf]
  %v770 = vld [vmem:[%s759 + $0x28] sm:$0xf]
  %v771 = vld [vmem:[%s759 + $0x2c] sm:$0xf]
  %v772 = vld [vmem:[%s759 + $0x30] sm:$0xf]
  %v773 = vld [vmem:[%s759 + $0x34] sm:$0xf]
  %v774 = vld [vmem:[%s759 + $0x38] sm:$0xf]
  %v775 = vld [vmem:[%s759 + $0x3c] sm:$0xf]
  %v776 = vld [vmem:[%s759 + $0x40] sm:$0xf]
  %v777 = vld [vmem:[%s759 + $0x44] sm:$0xf]
  %v778 = vld [vmem:[%s759 + $0x48] sm:$0xf]
  %v779 = vld [vmem:[%s759 + $0x4c] sm:$0xf]
  %v780 = vld [vmem:[%s759 + $0x50] sm:$0xf]
  %v781 = vld [vmem:[%s759 + $0x54] sm:$0xf]
  %v782 = vld [vmem:[%s759 + $0x58] sm:$0xf]
  %v783 = vld [vmem:[%s759 + $0x5c] sm:$0xf]
  %v784 = vld [vmem:[%s759 + $0x60] sm:$0xf]
  %v785 = vld [vmem:[%s759 + $0x64] sm:$0xf]
  %v786 = vld [vmem:[%s759 + $0x68] sm:$0xf]
  %v787 = vld [vmem:[%s759 + $0x6c] sm:$0xf]
  %v788 = vld [vmem:[%s759 + $0x70] sm:$0xf]
  %v789 = vld [vmem:[%s759 + $0x74] sm:$0xf]
  %v790 = vld [vmem:[%s759 + $0x78] sm:$0xf]
  %v791 = vld [vmem:[%s759 + $0x7c] sm:$0xf]
  %vm792 = vsmask.f32 7424
  %v794 = vshrl.u32 %v709, 16
  %v796 = vshll.u32 %v709, 16
  %v798 = vrot.slane %v796, 1
  %v799 = vor.u32 %v794, %v798
  %v801 = vshll.u32 %v711, 16
  %v803 = vrot.slane %v801, 1
  %v804 = vsel %vm792, %v799, %v803
  %v806 = vshrl.u32 %v710, 16
  %v808 = vshll.u32 %v710, 16
  %v810 = vrot.slane %v808, 1
  %v811 = vor.u32 %v806, %v810
  %v813 = vshll.u32 %v712, 16
  %v815 = vrot.slane %v813, 1
  %v816 = vsel %vm792, %v811, %v815
  %v817 = vshrl.u32 %v711, 16
  %v819 = vor.u32 %v817, %v803
  %v821 = vshll.u32 %v713, 16
  %v823 = vrot.slane %v821, 1
  %v824 = vsel %vm792, %v819, %v823
  %v825 = vshrl.u32 %v712, 16
  %v827 = vor.u32 %v825, %v815
  %v829 = vshll.u32 %v714, 16
  %v831 = vrot.slane %v829, 1
  %v832 = vsel %vm792, %v827, %v831
  %v833 = vshrl.u32 %v713, 16
  %v835 = vor.u32 %v833, %v823
  %v837 = vshll.u32 %v715, 16
  %v839 = vrot.slane %v837, 1
  %v840 = vsel %vm792, %v835, %v839
  %v841 = vshrl.u32 %v714, 16
  %v843 = vor.u32 %v841, %v831
  %v845 = vshll.u32 %v716, 16
  %v847 = vrot.slane %v845, 1
  %v848 = vsel %vm792, %v843, %v847
  %v849 = vshrl.u32 %v715, 16
  %v851 = vor.u32 %v849, %v839
  %v853 = vshll.u32 %v717, 16
  %v855 = vrot.slane %v853, 1
  %v856 = vsel %vm792, %v851, %v855
  %v857 = vshrl.u32 %v716, 16
  %v859 = vor.u32 %v857, %v847
  %v861 = vshll.u32 %v718, 16
  %v863 = vrot.slane %v861, 1
  %v864 = vsel %vm792, %v859, %v863
  %v905 = vunpack.c.l.b16 %v760
  %v906 = vunpack.c.l.b16 %v761
  %v907 = vunpack.c.l.b16 %v762
  %v908 = vunpack.c.l.b16 %v763
  %v909 = vunpack.c.l.b16 %v764
  %v910 = vunpack.c.l.b16 %v765
  %v911 = vunpack.c.l.b16 %v766
  %v912 = vunpack.c.l.b16 %v767
  %v913 = vunpack.c.l.b16 %v768
  %v914 = vunpack.c.l.b16 %v769
  %v915 = vunpack.c.l.b16 %v770
  %v916 = vunpack.c.l.b16 %v771
  %v917 = vunpack.c.l.b16 %v772
  %v918 = vunpack.c.l.b16 %v773
  %v919 = vunpack.c.l.b16 %v774
  %v920 = vunpack.c.l.b16 %v775
  %v921 = vunpack.c.l.b16 %v776
  %v922 = vunpack.c.l.b16 %v777
  %v923 = vunpack.c.l.b16 %v778
  %v924 = vunpack.c.l.b16 %v779
  %v925 = vunpack.c.l.b16 %v780
  %v926 = vunpack.c.l.b16 %v781
  %v927 = vunpack.c.l.b16 %v782
  %v928 = vunpack.c.l.b16 %v783
  %v929 = vunpack.c.l.b16 %v784
  %v930 = vunpack.c.l.b16 %v785
  %v931 = vunpack.c.l.b16 %v786
  %v932 = vunpack.c.l.b16 %v787
  %v933 = vunpack.c.l.b16 %v788
  %v934 = vunpack.c.l.b16 %v789
  %v935 = vunpack.c.l.b16 %v790
  %v936 = vunpack.c.l.b16 %v791
  %v937 = vpack.c.b16 %v906, %v905
  %v938 = vpack.c.b16 %v908, %v907
  %v939 = vpack.c.b16 %v910, %v909
  %v940 = vpack.c.b16 %v912, %v911
  %v941 = vpack.c.b16 %v914, %v913
  %v942 = vpack.c.b16 %v916, %v915
  %v943 = vpack.c.b16 %v918, %v917
  %v944 = vpack.c.b16 %v920, %v919
  %v945 = vpack.c.b16 %v922, %v921
  %v946 = vpack.c.b16 %v924, %v923
  %v947 = vpack.c.b16 %v926, %v925
  %v948 = vpack.c.b16 %v928, %v927
  %v949 = vpack.c.b16 %v930, %v929
  %v950 = vpack.c.b16 %v932, %v931
  %v951 = vpack.c.b16 %v934, %v933
  %v952 = vpack.c.b16 %v936, %v935
  %969 = vmatprep.subr.bf16.mxu0 0
  %970 = vmatpush1.bf16.msra.mxu0 %v937
  %971 = vmatprep.subr.bf16.mxu0 0
  %972 = vmatpush1.bf16.msra.mxu0 %v938
  %973 = vmatprep.subr.bf16.mxu0 0
  %974 = vmatpush1.bf16.msra.mxu0 %v939
  %975 = vmatprep.subr.bf16.mxu0 0
  %976 = vmatpush1.bf16.msra.mxu0 %v940
  %977 = vmatprep.subr.bf16.mxu0 0
  %978 = vmatpush1.bf16.msra.mxu0 %v941
  %979 = vmatprep.subr.bf16.mxu0 0
  %980 = vmatpush1.bf16.msra.mxu0 %v942
  %981 = vmatprep.subr.bf16.mxu0 0
  %982 = vmatpush1.bf16.msra.mxu0 %v943
  %983 = vmatprep.subr.bf16.mxu0 0
  %984 = vmatpush1.bf16.msra.mxu0 %v944
  %985 = vmatprep.subr.bf16.mxu0 0
  %986 = vmatpush1.bf16.msra.mxu0 %v945
  %987 = vmatprep.subr.bf16.mxu0 0
  %988 = vmatpush1.bf16.msra.mxu0 %v946
  %989 = vmatprep.subr.bf16.mxu0 0
  %990 = vmatpush1.bf16.msra.mxu0 %v947
  %991 = vmatprep.subr.bf16.mxu0 0
  %992 = vmatpush1.bf16.msra.mxu0 %v948
  %993 = vmatprep.subr.bf16.mxu0 0
  %994 = vmatpush1.bf16.msra.mxu0 %v949
  %995 = vmatprep.subr.bf16.mxu0 0
  %996 = vmatpush1.bf16.msra.mxu0 %v950
  %997 = vmatprep.subr.bf16.mxu0 0
  %998 = vmatpush1.bf16.msra.mxu0 %v951
  %999 = vmatprep.subr.bf16.mxu0 0
  %1000 = vmatpush1.bf16.msra.mxu0 %v952
  %1001 = vmatprep.mubr.bf16.mxu0 %v816
  %1002 = vmatmul.mubr.bf16.gmra.mrb[0].mxu0 %v804
  %v1003 = vpop.f32.mrb[0].mxu0
  %v1004 = vadd.f32 0.0, %v1003
  %v1005 = vpop.f32.mrb[0].mxu0
  %v1006 = vpop.f32.mrb[0].mxu0
  %v1007 = vadd.f32 0.0, %v1006
  %v1008 = vpop.f32.mrb[0].mxu0
  %1009 = vmatprep.mubr.bf16.mxu0 %v832
  %1010 = vmatmul.mubr.bf16.gmra.mrb[0].mxu0 %v824
  %v1011 = vpop.f32.mrb[0].mxu0
  %v1012 = vadd.f32 0.0, %v1011
  %v1013 = vpop.f32.mrb[0].mxu0
  %v1014 = vpop.f32.mrb[0].mxu0
  %v1015 = vadd.f32 0.0, %v1014
  %v1016 = vpop.f32.mrb[0].mxu0
  %1017 = vmatprep.mubr.bf16.mxu0 %v848
  %1018 = vmatmul.mubr.bf16.gmra.mrb[0].mxu0 %v840
  %v1019 = vpop.f32.mrb[0].mxu0
  %v1020 = vadd.f32 0.0, %v1019
  %v1021 = vpop.f32.mrb[0].mxu0
  %v1022 = vpop.f32.mrb[0].mxu0
  %v1023 = vadd.f32 0.0, %v1022
  %v1024 = vpop.f32.mrb[0].mxu0
  %1025 = vmatprep.mubr.bf16.mxu0 %v864
  %1026 = vmatmul.mubr.bf16.gmra.mrb[0].mxu0 %v856
  %v1027 = vpop.f32.mrb[0].mxu0
  %v1028 = vadd.f32 0.0, %v1027
  %v1029 = vpop.f32.mrb[0].mxu0
  %v1030 = vpop.f32.mrb[0].mxu0
  %v1031 = vadd.f32 0.0, %v1030
  %v1032 = vpop.f32.mrb[0].mxu0
  %1033 = vdwg.mxu0
  %v1066 = vunpack.c.l.b16 %v727
  %v1067 = vunpack.c.l.b16 %v728
  %v1068 = vunpack.c.l.b16 %v729
  %v1069 = vunpack.c.l.b16 %v730
  %v1070 = vunpack.c.l.b16 %v731
  %v1071 = vunpack.c.l.b16 %v732
  %v1072 = vunpack.c.l.b16 %v733
  %v1073 = vunpack.c.l.b16 %v734
  %v1074 = vunpack.c.l.b16 %v735
  %v1075 = vunpack.c.l.b16 %v736
  %v1076 = vunpack.c.l.b16 %v737
  %v1077 = vunpack.c.l.b16 %v738
  %v1078 = vunpack.c.l.b16 %v739
  %v1079 = vunpack.c.l.b16 %v740
  %v1080 = vunpack.c.l.b16 %v741
  %v1081 = vunpack.c.l.b16 %v742
  %v1082 = vunpack.c.l.b16 %v743
  %v1083 = vunpack.c.l.b16 %v744
  %v1084 = vunpack.c.l.b16 %v745
  %v1085 = vunpack.c.l.b16 %v746
  %v1086 = vunpack.c.l.b16 %v747
  %v1087 = vunpack.c.l.b16 %v748
  %v1088 = vunpack.c.l.b16 %v749
  %v1089 = vunpack.c.l.b16 %v750
  %v1090 = vunpack.c.l.b16 %v751
  %v1091 = vunpack.c.l.b16 %v752
  %v1092 = vunpack.c.l.b16 %v753
  %v1093 = vunpack.c.l.b16 %v754
  %v1094 = vunpack.c.l.b16 %v755
  %v1095 = vunpack.c.l.b16 %v756
  %v1096 = vunpack.c.l.b16 %v757
  %v1097 = vunpack.c.l.b16 %v758
  %v1098 = vpack.c.b16 %v1067, %v1066
  %v1099 = vpack.c.b16 %v1069, %v1068
  %v1100 = vpack.c.b16 %v1071, %v1070
  %v1101 = vpack.c.b16 %v1073, %v1072
  %v1102 = vpack.c.b16 %v1075, %v1074
  %v1103 = vpack.c.b16 %v1077, %v1076
  %v1104 = vpack.c.b16 %v1079, %v1078
  %v1105 = vpack.c.b16 %v1081, %v1080
  %v1106 = vpack.c.b16 %v1083, %v1082
  %v1107 = vpack.c.b16 %v1085, %v1084
  %v1108 = vpack.c.b16 %v1087, %v1086
  %v1109 = vpack.c.b16 %v1089, %v1088
  %v1110 = vpack.c.b16 %v1091, %v1090
  %v1111 = vpack.c.b16 %v1093, %v1092
  %v1112 = vpack.c.b16 %v1095, %v1094
  %v1113 = vpack.c.b16 %v1097, %v1096
  %1130 = vmatprep.subr.bf16.mxu0 0
  %1131 = vmatpush1.bf16.msra.mxu0 %v1098
  %1132 = vmatprep.subr.bf16.mxu0 0
  %1133 = vmatpush1.bf16.msra.mxu0 %v1099
  %1134 = vmatprep.subr.bf16.mxu0 0
  %1135 = vmatpush1.bf16.msra.mxu0 %v1100
  %1136 = vmatprep.subr.bf16.mxu0 0
  %1137 = vmatpush1.bf16.msra.mxu0 %v1101
  %1138 = vmatprep.subr.bf16.mxu0 0
  %1139 = vmatpush1.bf16.msra.mxu0 %v1102
  %1140 = vmatprep.subr.bf16.mxu0 0
  %1141 = vmatpush1.bf16.msra.mxu0 %v1103
  %1142 = vmatprep.subr.bf16.mxu0 0
  %1143 = vmatpush1.bf16.msra.mxu0 %v1104
  %1144 = vmatprep.subr.bf16.mxu0 0
  %1145 = vmatpush1.bf16.msra.mxu0 %v1105
  %1146 = vmatprep.subr.bf16.mxu0 0
  %1147 = vmatpush1.bf16.msra.mxu0 %v1106
  %1148 = vmatprep.subr.bf16.mxu0 0
  %1149 = vmatpush1.bf16.msra.mxu0 %v1107
  %1150 = vmatprep.subr.bf16.mxu0 0
  %1151 = vmatpush1.bf16.msra.mxu0 %v1108
  %1152 = vmatprep.subr.bf16.mxu0 0
  %1153 = vmatpush1.bf16.msra.mxu0 %v1109
  %1154 = vmatprep.subr.bf16.mxu0 0
  %1155 = vmatpush1.bf16.msra.mxu0 %v1110
  %1156 = vmatprep.subr.bf16.mxu0 0
  %1157 = vmatpush1.bf16.msra.mxu0 %v1111
  %1158 = vmatprep.subr.bf16.mxu0 0
  %1159 = vmatpush1.bf16.msra.mxu0 %v1112
  %1160 = vmatprep.subr.bf16.mxu0 0
  %1161 = vmatpush1.bf16.msra.mxu0 %v1113
  %1162 = vmatprep.mubr.bf16.mxu0 %v684
  %1163 = vmatmul.mubr.bf16.gmra.mrb[0].mxu0 %v683
  %v1164 = vpop.f32.mrb[0].mxu0
  %v1165 = vadd.f32 %v1004, %v1164
  %v1166 = vpop.f32.mrb[0].mxu0
  %v1167 = vpop.f32.mrb[0].mxu0
  %v1168 = vadd.f32 %v1007, %v1167
  %v1169 = vpop.f32.mrb[0].mxu0
  %1170 = vmatprep.mubr.bf16.mxu0 %v686
  %1171 = vmatmul.mubr.bf16.gmra.mrb[0].mxu0 %v685
  %v1172 = vpop.f32.mrb[0].mxu0
  %v1173 = vadd.f32 %v1012, %v1172
  %v1174 = vpop.f32.mrb[0].mxu0
  %v1175 = vpop.f32.mrb[0].mxu0
  %v1176 = vadd.f32 %v1015, %v1175
  %v1177 = vpop.f32.mrb[0].mxu0
  %1178 = vmatprep.mubr.bf16.mxu0 %v688
  %1179 = vmatmul.mubr.bf16.gmra.mrb[0].mxu0 %v687
  %v1180 = vpop.f32.mrb[0].mxu0
  %v1181 = vadd.f32 %v1020, %v1180
  %v1182 = vpop.f32.mrb[0].mxu0
  %v1183 = vpop.f32.mrb[0].mxu0
  %v1184 = vadd.f32 %v1023, %v1183
  %v1185 = vpop.f32.mrb[0].mxu0
  %1186 = vmatprep.mubr.bf16.mxu0 %v690
  %1187 = vmatmul.mubr.bf16.gmra.mrb[0].mxu0 %v689
  %v1188 = vpop.f32.mrb[0].mxu0
  %v1189 = vadd.f32 %v1028, %v1188
  %v1190 = vpop.f32.mrb[0].mxu0
  %v1191 = vpop.f32.mrb[0].mxu0
  %v1192 = vadd.f32 %v1031, %v1191
  %v1193 = vpop.f32.mrb[0].mxu0
  %1194 = vdwg.mxu0
  %s1195 = scalar_lea.vmem %s2, 256
  %v1196 = vld [vmem:[%s1195] sm:$0xf]
  %v1197 = vld [vmem:[%s1195 + $0x4] sm:$0xf]
  %v1198 = vld [vmem:[%s1195 + $0x8] sm:$0xf]
  %v1199 = vld [vmem:[%s1195 + $0xc] sm:$0xf]
  %v1200 = vld [vmem:[%s1195 + $0x10] sm:$0xf]
  %v1201 = vld [vmem:[%s1195 + $0x14] sm:$0xf]
  %v1202 = vld [vmem:[%s1195 + $0x18] sm:$0xf]
  %v1203 = vld [vmem:[%s1195 + $0x1c] sm:$0xf]
  %v1204 = vld [vmem:[%s1195 + $0x20] sm:$0xf]
  %v1205 = vld [vmem:[%s1195 + $0x24] sm:$0xf]
  %v1206 = vld [vmem:[%s1195 + $0x28] sm:$0xf]
  %v1207 = vld [vmem:[%s1195 + $0x2c] sm:$0xf]
  %v1208 = vld [vmem:[%s1195 + $0x30] sm:$0xf]
  %v1209 = vld [vmem:[%s1195 + $0x34] sm:$0xf]
  %v1210 = vld [vmem:[%s1195 + $0x38] sm:$0xf]
  %v1211 = vld [vmem:[%s1195 + $0x3c] sm:$0xf]
  %v1212 = vld [vmem:[%s1195 + $0x40] sm:$0xf]
  %v1213 = vld [vmem:[%s1195 + $0x44] sm:$0xf]
  %v1214 = vld [vmem:[%s1195 + $0x48] sm:$0xf]
  %v1215 = vld [vmem:[%s1195 + $0x4c] sm:$0xf]
  %v1216 = vld [vmem:[%s1195 + $0x50] sm:$0xf]
  %v1217 = vld [vmem:[%s1195 + $0x54] sm:$0xf]
  %v1218 = vld [vmem:[%s1195 + $0x58] sm:$0xf]
  %v1219 = vld [vmem:[%s1195 + $0x5c] sm:$0xf]
  %v1220 = vld [vmem:[%s1195 + $0x60] sm:$0xf]
  %v1221 = vld [vmem:[%s1195 + $0x64] sm:$0xf]
  %v1222 = vld [vmem:[%s1195 + $0x68] sm:$0xf]
  %v1223 = vld [vmem:[%s1195 + $0x6c] sm:$0xf]
  %v1224 = vld [vmem:[%s1195 + $0x70] sm:$0xf]
  %v1225 = vld [vmem:[%s1195 + $0x74] sm:$0xf]
  %v1226 = vld [vmem:[%s1195 + $0x78] sm:$0xf]
  %v1227 = vld [vmem:[%s1195 + $0x7c] sm:$0xf]
  %vm1238 = vcmask 1046528
  %v1239 = vrot.slane %v723, 1
  %v1240 = vrot.slane %v711, 1
  %v1241 = vsel %vm1238, %v1239, %v1240
  %v1242 = vrot.slane %v724, 1
  %v1243 = vrot.slane %v712, 1
  %v1244 = vsel %vm1238, %v1242, %v1243
  %v1245 = vrot.slane %v713, 1
  %v1246 = vsel %vm1238, %v1240, %v1245
  %v1247 = vrot.slane %v714, 1
  %v1248 = vsel %vm1238, %v1243, %v1247
  %v1249 = vrot.slane %v715, 1
  %v1250 = vsel %vm1238, %v1245, %v1249
  %v1251 = vrot.slane %v716, 1
  %v1252 = vsel %vm1238, %v1247, %v1251
  %v1253 = vrot.slane %v725, 1
  %v1254 = vsel %vm1238, %v1249, %v1253
  %v1255 = vrot.slane %v726, 1
  %v1256 = vsel %vm1238, %v1251, %v1255
  %v1297 = vunpack.c.l.b16 %v1196
  %v1298 = vunpack.c.l.b16 %v1197
  %v1299 = vunpack.c.l.b16 %v1198
  %v1300 = vunpack.c.l.b16 %v1199
  %v1301 = vunpack.c.l.b16 %v1200
  %v1302 = vunpack.c.l.b16 %v1201
  %v1303 = vunpack.c.l.b16 %v1202
  %v1304 = vunpack.c.l.b16 %v1203
  %v1305 = vunpack.c.l.b16 %v1204
  %v1306 = vunpack.c.l.b16 %v1205
  %v1307 = vunpack.c.l.b16 %v1206
  %v1308 = vunpack.c.l.b16 %v1207
  %v1309 = vunpack.c.l.b16 %v1208
  %v1310 = vunpack.c.l.b16 %v1209
  %v1311 = vunpack.c.l.b16 %v1210
  %v1312 = vunpack.c.l.b16 %v1211
  %v1313 = vunpack.c.l.b16 %v1212
  %v1314 = vunpack.c.l.b16 %v1213
  %v1315 = vunpack.c.l.b16 %v1214
  %v1316 = vunpack.c.l.b16 %v1215
  %v1317 = vunpack.c.l.b16 %v1216
  %v1318 = vunpack.c.l.b16 %v1217
  %v1319 = vunpack.c.l.b16 %v1218
  %v1320 = vunpack.c.l.b16 %v1219
  %v1321 = vunpack.c.l.b16 %v1220
  %v1322 = vunpack.c.l.b16 %v1221
  %v1323 = vunpack.c.l.b16 %v1222
  %v1324 = vunpack.c.l.b16 %v1223
  %v1325 = vunpack.c.l.b16 %v1224
  %v1326 = vunpack.c.l.b16 %v1225
  %v1327 = vunpack.c.l.b16 %v1226
  %v1328 = vunpack.c.l.b16 %v1227
  %v1329 = vpack.c.b16 %v1298, %v1297
  %v1330 = vpack.c.b16 %v1300, %v1299
  %v1331 = vpack.c.b16 %v1302, %v1301
  %v1332 = vpack.c.b16 %v1304, %v1303
  %v1333 = vpack.c.b16 %v1306, %v1305
  %v1334 = vpack.c.b16 %v1308, %v1307
  %v1335 = vpack.c.b16 %v1310, %v1309
  %v1336 = vpack.c.b16 %v1312, %v1311
  %v1337 = vpack.c.b16 %v1314, %v1313
  %v1338 = vpack.c.b16 %v1316, %v1315
  %v1339 = vpack.c.b16 %v1318, %v1317
  %v1340 = vpack.c.b16 %v1320, %v1319
  %v1341 = vpack.c.b16 %v1322, %v1321
  %v1342 = vpack.c.b16 %v1324, %v1323
  %v1343 = vpack.c.b16 %v1326, %v1325
  %v1344 = vpack.c.b16 %v1328, %v1327
  %1361 = vmatprep.subr.bf16.mxu0 0
  %1362 = vmatpush1.bf16.msra.mxu0 %v1329
  %1363 = vmatprep.subr.bf16.mxu0 0
  %1364 = vmatpush1.bf16.msra.mxu0 %v1330
  %1365 = vmatprep.subr.bf16.mxu0 0
  %1366 = vmatpush1.bf16.msra.mxu0 %v1331
  %1367 = vmatprep.subr.bf16.mxu0 0
  %1368 = vmatpush1.bf16.msra.mxu0 %v1332
  %1369 = vmatprep.subr.bf16.mxu0 0
  %1370 = vmatpush1.bf16.msra.mxu0 %v1333
  %1371 = vmatprep.subr.bf16.mxu0 0
  %1372 = vmatpush1.bf16.msra.mxu0 %v1334
  %1373 = vmatprep.subr.bf16.mxu0 0
  %1374 = vmatpush1.bf16.msra.mxu0 %v1335
  %1375 = vmatprep.subr.bf16.mxu0 0
  %1376 = vmatpush1.bf16.msra.mxu0 %v1336
  %1377 = vmatprep.subr.bf16.mxu0 0
  %1378 = vmatpush1.bf16.msra.mxu0 %v1337
  %1379 = vmatprep.subr.bf16.mxu0 0
  %1380 = vmatpush1.bf16.msra.mxu0 %v1338
  %1381 = vmatprep.subr.bf16.mxu0 0
  %1382 = vmatpush1.bf16.msra.mxu0 %v1339
  %1383 = vmatprep.subr.bf16.mxu0 0
  %1384 = vmatpush1.bf16.msra.mxu0 %v1340
  %1385 = vmatprep.subr.bf16.mxu0 0
  %1386 = vmatpush1.bf16.msra.mxu0 %v1341
  %1387 = vmatprep.subr.bf16.mxu0 0
  %1388 = vmatpush1.bf16.msra.mxu0 %v1342
  %1389 = vmatprep.subr.bf16.mxu0 0
  %1390 = vmatpush1.bf16.msra.mxu0 %v1343
  %1391 = vmatprep.subr.bf16.mxu0 0
  %1392 = vmatpush1.bf16.msra.mxu0 %v1344
  %1393 = vmatprep.mubr.bf16.mxu0 %v1244
  %1394 = vmatmul.mubr.bf16.gmra.mrb[0].mxu0 %v1241
  %v1395 = vpop.f32.mrb[0].mxu0
  %v1396 = vadd.f32 0.0, %v1395
  %v1397 = vpop.f32.mrb[0].mxu0
  %v1398 = vpop.f32.mrb[0].mxu0
  %v1399 = vadd.f32 0.0, %v1398
  %v1400 = vpop.f32.mrb[0].mxu0
  %1401 = vmatprep.mubr.bf16.mxu0 %v1248
  %1402 = vmatmul.mubr.bf16.gmra.mrb[0].mxu0 %v1246
  %v1403 = vpop.f32.mrb[0].mxu0
  %v1404 = vadd.f32 0.0, %v1403
  %v1405 = vpop.f32.mrb[0].mxu0
  %v1406 = vpop.f32.mrb[0].mxu0
  %v1407 = vadd.f32 0.0, %v1406
  %v1408 = vpop.f32.mrb[0].mxu0
  %1409 = vmatprep.mubr.bf16.mxu0 %v1252
  %1410 = vmatmul.mubr.bf16.gmra.mrb[0].mxu0 %v1250
  %v1411 = vpop.f32.mrb[0].mxu0
  %v1412 = vadd.f32 0.0, %v1411
  %v1413 = vpop.f32.mrb[0].mxu0
  %v1414 = vpop.f32.mrb[0].mxu0
  %v1415 = vadd.f32 0.0, %v1414
  %v1416 = vpop.f32.mrb[0].mxu0
  %1417 = vmatprep.mubr.bf16.mxu0 %v1256
  %1418 = vmatmul.mubr.bf16.gmra.mrb[0].mxu0 %v1254
  %v1419 = vpop.f32.mrb[0].mxu0
  %v1420 = vadd.f32 0.0, %v1419
  %v1421 = vpop.f32.mrb[0].mxu0
  %v1422 = vpop.f32.mrb[0].mxu0
  %v1423 = vadd.f32 0.0, %v1422
  %v1424 = vpop.f32.mrb[0].mxu0
  %1425 = vdwg.mxu0
  %v1426 = vadd.f32 %v1165, %v1396
  %v1427 = vadd.f32 %v1168, %v1399
  %v1428 = vadd.f32 %v1173, %v1404
  %v1429 = vadd.f32 %v1176, %v1407
  %v1430 = vadd.f32 %v1181, %v1412
  %v1431 = vadd.f32 %v1184, %v1415
  %v1432 = vadd.f32 %v1189, %v1420
  %v1433 = vadd.f32 %v1192, %v1423
  %v1434 = vmax.f32 %v1426, 0.0
  %v1435 = vmax.f32 %v1427, 0.0
  %v1436 = vmax.f32 %v1428, 0.0
  %v1437 = vmax.f32 %v1429, 0.0
  %v1438 = vmax.f32 %v1430, 0.0
  %v1439 = vmax.f32 %v1431, 0.0
  %v1440 = vmax.f32 %v1432, 0.0
  %v1441 = vmax.f32 %v1433, 0.0
  %1442 = vst [vmem:[%s3] sm:$0xff] %v1434
  %1443 = vst [vmem:[%s3 + $0x8] sm:$0xff] %v1435
  %1444 = vst [vmem:[%s3 + $0x10] sm:$0xff] %v1436
  %1445 = vst [vmem:[%s3 + $0x18] sm:$0xff] %v1437
  %1446 = vst [vmem:[%s3 + $0x20] sm:$0xff] %v1438
  %1447 = vst [vmem:[%s3 + $0x28] sm:$0xff] %v1439
  %1448 = vst [vmem:[%s3 + $0x30] sm:$0xff] %v1440
  %1449 = vst [vmem:[%s3 + $0x38] sm:$0xff] %v1441
  // Predicated region
  $region14: #{a_call__.1} parent=0 // pred_check
    _
  $region15: #{a_call__.1} parent=0 // pred_check_branch
    %1451 = sbr.rel (0) target = $region17
  $region16: #{a_call__.1} parent=0 // pred_region
    _
  $region17: #{a_call__.1} parent=0 // pred_fallthru
    _
  // Predicated region
  $region18: #{a_call__.1} parent=0 // pred_check
    _
  $region19: #{a_call__.1} parent=0 // pred_check_branch
    %1453 = sbr.rel (0) target = $region21
  $region20: #{a_call__.1} parent=0 // pred_region
    _
  $region21: #{a_call__.1} parent=0 // pred_fallthru
    _

</llo_original>
